<compile_context>
chip_gen: v6e
topology: v6e:2x2x1
jax: 0.10.0
libtpu: 0.0.40
codegen_flags: <defaults>
</compile_context>

<pallas_src>
import functools

import jax
import jax.numpy as jnp
from jax.experimental import pallas as pl
from jax.experimental.pallas import tpu as pltpu


def _fm_kernel(K, x_ref, vext_ref, s_ref, b_ref, out_ref):
    x = x_ref[...]                                   # (TB, F)  compute dtype (f32/bf16)

    # One MXU pass: [x @ V | x @ w]  -> (TB, K+1), accumulated in f32.
    xv_ext = jnp.dot(x, vext_ref[...], preferred_element_type=jnp.float32)
    xv = xv_ext[:, :K]                               # (TB, K)
    linear = xv_ext[:, K:K + 1]                      # (TB, 1)

    # x^2 correction term on the VPU/XLU (f32): (x*x) . rowsum(V*V).
    xf = x.astype(jnp.float32)
    s_row = s_ref[...]                               # (1, F) f32, grid-invariant
    x2s = jnp.sum(xf * xf * s_row, axis=-1, keepdims=True)          # (TB, 1)

    interaction = 0.5 * (jnp.sum(xv * xv, axis=-1, keepdims=True) - x2s)
    logit = linear + interaction + b_ref[0, 0]       # scalar bias from SMEM
    out_ref[...] = jax.nn.sigmoid(logit).astype(out_ref.dtype)


def _pick_batch_tile(B, F, itemsize, max_tile=1024, x_budget_bytes=8 << 20):
    """Largest power-of-two tile (>=128 rows) whose double-buffered x block fits the budget."""
    tb = max_tile
    while tb > 128 and 2 * tb * F * itemsize > x_budget_bytes:
        tb //= 2
    return tb


def fmctr_forward(x, w, v, bias, *, tb=None, compute_dtype=None):
    """FM-CTR forward. x:(B,F), w:(F,1), v:(F,K), bias:(1,1) -> sigmoid logits (B,1) f32."""
    B, F = x.shape
    K = v.shape[1]
    if compute_dtype is None:
        compute_dtype = x.dtype
    compute_dtype = jnp.dtype(compute_dtype)
    itemsize = compute_dtype.itemsize

    if tb is None:
        tb = _pick_batch_tile(B, F, itemsize)
        tb = min(tb, ((B + 127) // 128) * 128)      # don't over-tile tiny batches
    tb = max(8, int(tb))
    nb = pl.cdiv(B, tb)
    b_pad = nb * tb

    # Grid-invariant weight preprocessing, hoisted out of the kernel:
    #   V_ext = [V | w]       -> fuses the linear term into the interaction matmul.
    #   s     = rowsum(V*V)   -> turns the x^2 correction into a VPU dot (kept f32).
    vext = jnp.concatenate([v, w], axis=1).astype(compute_dtype)          # (F, K+1)
    s_row = jnp.sum(v.astype(jnp.float32) ** 2, axis=1).reshape(1, F)     # (1, F) f32
    bias32 = jnp.asarray(bias, jnp.float32).reshape(1, 1)                 # (1, 1) f32 (SMEM)

    xc = x.astype(compute_dtype)
    if b_pad != B:
        xc = jnp.pad(xc, ((0, b_pad - B), (0, 0)))   # padded rows are sliced off below

    cost = pl.CostEstimate(
        flops=int(2 * b_pad * F * (K + 1) + 6 * b_pad * F + 4 * b_pad * K),
        transcendentals=int(b_pad),
        bytes_accessed=int(b_pad * F * itemsize + F * (K + 1) * itemsize
                           + F * 4 + b_pad * 4 + 4),
    )

    out = pl.pallas_call(
        functools.partial(_fm_kernel, K),
        out_shape=jax.ShapeDtypeStruct((b_pad, 1), jnp.float32),
        grid=(nb,),
        in_specs=[
            pl.BlockSpec((tb, F), lambda i: (i, 0)),             # x: streamed per batch tile
            pl.BlockSpec((F, K + 1), lambda i: (0, 0)),          # V_ext: VMEM-resident
            pl.BlockSpec((1, F), lambda i: (0, 0)),              # s: VMEM-resident (f32)
            pl.BlockSpec(memory_space=pltpu.MemorySpace.SMEM),   # bias: scalar in SMEM
        ],
        out_specs=pl.BlockSpec((tb, 1), lambda i: (i, 0)),
        compiler_params=pltpu.CompilerParams(
            dimension_semantics=("parallel",),
            vmem_limit_bytes=32 * 1024 * 1024,
        ),
        cost_estimate=cost,
    )(xc, vext, s_row, bias32)

    return out[:B]


def fmctr_reference(x, w, v, bias):
    x = x.astype(jnp.float32)
    w = w.astype(jnp.float32)
    v = v.astype(jnp.float32)
    linear = x @ w
    xv = x @ v
    x2v2 = (x * x) @ (v * v)
    interaction = 0.5 * jnp.sum(xv * xv - x2v2, axis=-1, keepdims=True)
    return jax.nn.sigmoid(linear + interaction + jnp.asarray(bias, jnp.float32).reshape(1, 1))


if __name__ == "__main__":
    key = jax.random.PRNGKey(0)
    kx1, kx2, kw, kv, kb = jax.random.split(key, 5)

    F, K = 32, 16
    w = 0.1 * jax.random.normal(kw, (F, 1), dtype=jnp.float32)     # linear weights
    v = 0.1 * jax.random.normal(kv, (F, K), dtype=jnp.float32)     # FM latent factors
    bias = 0.1 * jax.random.normal(kb, (1, 1), dtype=jnp.float32)  # global bias w0

    # f32 path, batch an exact multiple of the tile -> grid of 2 steps.
    # (Tolerance accounts for MXU f32 matmul pass decomposition vs. the XLA reference.)
    B1 = 256
    x1 = jax.random.normal(kx1, (B1, F), dtype=jnp.float32)
    out1 = jax.block_until_ready(fmctr_forward(x1, w, v, bias, tb=128))
    ref1 = fmctr_reference(x1, w, v, bias)
    assert out1.shape == (B1, 1)
    assert jnp.allclose(out1, ref1, atol=5e-3, rtol=5e-3)

    # bf16 streaming path (v6e/v7x optimization); B not a multiple of the tile,
    # which exercises the zero-pad + slice handling.
    B2 = 200
    x2 = jax.random.normal(kx2, (B2, F), dtype=jnp.float32)
    out2 = jax.block_until_ready(
        fmctr_forward(x2, w, v, bias, tb=128, compute_dtype=jnp.bfloat16))
    ref2 = fmctr_reference(x2, w, v, bias)
    assert out2.shape == (B2, 1)
    assert jnp.allclose(out2, ref2, atol=5e-2, rtol=5e-2)

    print("KERNEL_OK")
</pallas_src>

<mosaic_0001>
module attributes {stable_mosaic.version = 11 : i64} {
  func.func @_fm_kernel(%arg0: i32, %arg1: memref<128x32xf32, #tpu.memory_space<vmem>>, %arg2: memref<32x17xf32, #tpu.memory_space<vmem>>, %arg3: memref<1x32xf32, #tpu.memory_space<vmem>>, %arg4: memref<1x1xf32, #tpu.memory_space<smem>>, %arg5: memref<128x1xf32, #tpu.memory_space<vmem>>) attributes {dimension_semantics = [#tpu.dimension_semantics<parallel>], iteration_bounds = array<i64: 2>, scalar_prefetch = 0 : i64, scratch_operands = 0 : i64, tpu.core_type = #tpu.core_type<tc>, window_params = [{transform_indices = @transform_0, window_bounds = array<i64: 128, 32>}, {pipeline_mode = #tpu.pipeline_mode<synchronous>, transform_indices = @transform_1, window_bounds = array<i64: 32, 17>}, {pipeline_mode = #tpu.pipeline_mode<synchronous>, transform_indices = @transform_2, window_bounds = array<i64: 1, 32>}, {transform_indices = @transform_3, window_bounds = array<i64: 1, 1>}, {transform_indices = @transform_4, window_bounds = array<i64: 128, 1>}]} {
    %c0 = arith.constant 0 : index
    %c0_0 = arith.constant 0 : index
    %0 = vector.load %arg1[%c0, %c0_0] : memref<128x32xf32, #tpu.memory_space<vmem>>, vector<128x32xf32>
    %c0_1 = arith.constant 0 : index
    %c0_2 = arith.constant 0 : index
    %1 = vector.load %arg2[%c0_1, %c0_2] : memref<32x17xf32, #tpu.memory_space<vmem>>, vector<32x17xf32>
    %cst = arith.constant dense<0.000000e+00> : vector<128x17xf32>
    %2 = tpu.matmul %0, %1, %cst {dimension_numbers = #tpu.dot_dimension_numbers<[1], [0], [0], [1], [0, 0, 1, 1], [], []>} : vector<128x32xf32>, vector<32x17xf32>, vector<128x17xf32> -> vector<128x17xf32>
    %3 = vector.extract_strided_slice %2 {offsets = [0, 0], sizes = [128, 16], strides = [1, 1]} : vector<128x17xf32> to vector<128x16xf32>
    %4 = vector.extract_strided_slice %2 {offsets = [0, 16], sizes = [128, 1], strides = [1, 1]} : vector<128x17xf32> to vector<128x1xf32>
    %c0_3 = arith.constant 0 : index
    %c0_4 = arith.constant 0 : index
    %5 = vector.load %arg3[%c0_3, %c0_4] : memref<1x32xf32, #tpu.memory_space<vmem>>, vector<1x32xf32>
    %6 = arith.mulf %0, %0 : vector<128x32xf32>
    %7 = vector.broadcast %5 : vector<1x32xf32> to vector<128x32xf32>
    %8 = arith.mulf %6, %7 : vector<128x32xf32>
    %cst_5 = arith.constant dense<0.000000e+00> : vector<128xf32>
    %9 = vector.multi_reduction <add>, %8, %cst_5 [1] : vector<128x32xf32> to vector<128xf32>
    %10 = vector.shape_cast %9 : vector<128xf32> to vector<128x1xf32>
    %11 = arith.mulf %3, %3 : vector<128x16xf32>
    %cst_6 = arith.constant dense<0.000000e+00> : vector<128xf32>
    %12 = vector.multi_reduction <add>, %11, %cst_6 [1] : vector<128x16xf32> to vector<128xf32>
    %13 = vector.shape_cast %12 : vector<128xf32> to vector<128x1xf32>
    %14 = arith.subf %13, %10 : vector<128x1xf32>
    %cst_7 = arith.constant 5.000000e-01 : f32
    %15 = vector.broadcast %cst_7 : f32 to vector<128x1xf32>
    %16 = arith.mulf %15, %14 : vector<128x1xf32>
    %17 = arith.addf %4, %16 : vector<128x1xf32>
    %c0_8 = arith.constant 0 : index
    %c0_9 = arith.constant 0 : index
    %18 = memref.load %arg4[%c0_8, %c0_9] : memref<1x1xf32, #tpu.memory_space<smem>>
    %19 = vector.broadcast %18 : f32 to vector<128x1xf32>
    %20 = arith.addf %17, %19 : vector<128x1xf32>
    %21 = arith.negf %20 : vector<128x1xf32>
    %22 = math.exp %21 : vector<128x1xf32>
    %cst_10 = arith.constant 1.000000e+00 : f32
    %23 = vector.broadcast %cst_10 : f32 to vector<128x1xf32>
    %24 = arith.addf %23, %22 : vector<128x1xf32>
    %25 = arith.divf %23, %24 : vector<128x1xf32>
    %c0_11 = arith.constant 0 : index
    %c0_12 = arith.constant 0 : index
    %26 = vector.load %arg5[%c0_11, %c0_12] : memref<128x1xf32, #tpu.memory_space<vmem>>, vector<128x1xf32>
    tpu.vector_store %arg5[%c0_11, %c0_12], %25 {strides = array<i32>} : memref<128x1xf32, #tpu.memory_space<vmem>>, vector<128x1xf32>,
    return
  }
  func.func @transform_0(%arg0: i32) -> (i32, i32) {
    %c0_i32 = arith.constant 0 : i32
    %c0_i32_0 = arith.constant 0 : i32
    return %arg0, %c0_i32 : i32, i32
  }
  func.func @transform_1(%arg0: i32) -> (i32, i32) {
    %c0_i32 = arith.constant 0 : i32
    %c0_i32_0 = arith.constant 0 : i32
    %c0_i32_1 = arith.constant 0 : i32
    return %c0_i32, %c0_i32_0 : i32, i32
  }
  func.func @transform_2(%arg0: i32) -> (i32, i32) {
    %c0_i32 = arith.constant 0 : i32
    %c0_i32_0 = arith.constant 0 : i32
    %c0_i32_1 = arith.constant 0 : i32
    return %c0_i32, %c0_i32_0 : i32, i32
  }
  func.func @transform_3(%arg0: i32) -> (i32, i32) {
    %c0_i32 = arith.constant 0 : i32
    %c0_i32_0 = arith.constant 0 : i32
    %c0_i32_1 = arith.constant 0 : i32
    return %c0_i32, %c0_i32_0 : i32, i32
  }
  func.func @transform_4(%arg0: i32) -> (i32, i32) {
    %c0_i32 = arith.constant 0 : i32
    %c0_i32_0 = arith.constant 0 : i32
    return %arg0, %c0_i32 : i32, i32
  }
}

</mosaic_0001>

<llo_original>
// kernel: tpu_custom_call.1
$region0: #{tpu_custom_call.1}
  #allocation0 [shape = 'u32[]', space=smem, size = 0x4, offset = 0x4, fixed_abs, tag = 'smem constant byte address 0x4 - core index']
  #allocation1 [shape = 'u32[144,128]{1,0:T(1,128)}', space=vmem, size = 0x12000, scoped, tag = 'internal scratch']
  #allocation2 [shape = 'f32[1,1]{1,0:T(1,128)S(6)}', space=smem, size = 0x200, scoped, tag = 'scoped memory for tpu_custom_call.1']
  %s0 = inlined_call_operand.vmem [shape: f32[256,32], index: 0, kind: input, shape index: {}]
  %s1 = inlined_call_operand.vmem [shape: f32[32,17], index: 1, kind: input, shape index: {}]
  %s2 = inlined_call_operand.vmem [shape: f32[1,32], index: 2, kind: input, shape index: {}]
  %s3 = inlined_call_operand.<no memory space> [shape: f32[1,1], index: 3, kind: input, shape index: {}]
  %s4 = inlined_call_operand.vmem [shape: f32[256,1], index: 4, kind: output, shape index: {}]
  %s5 = sld [smem:[#allocation0]]
  $region49: #{tpu_custom_call.1} parent=0
    _
  %s7 = ssub.s32 1, %s5
  %s8 = scalar_select 0, %s7, %s5
  %9 = sst [smem:[#allocation2]] %s3
  loop: start=0, step=1, limit=4
  $region2: #{tpu_custom_call.1} parent=0 // loop_pre_header
    _
  $region3: #{tpu_custom_call.1} parent=0 // loop_header
    %s11 = sphi 0, %s15
    %p12 = scmp.ge.s32.totalorder %s11, 4
    %s21 = sphi 0, %s23
    %s24 = sphi 0, %s21
    %s25 = sphi 0, %s24
    %s41 = sphi 0, %s25
    %s45 = sphi 0, %s45
    %s47 = sphi 0, %s45
    %s48 = sphi 0, %s47
    %s62 = sphi 0, %s48
    %s66 = sphi 0, %s66
    %s68 = sphi 0, %s66
    %s69 = sphi 0, %s68
    %s83 = sphi 0, %s69
    %s87 = sphi 0, %s87
    %s89 = sphi 0, %s87
    %s90 = sphi 0, %s89
    %s104 = sphi 0, %s90
    %s110 = sphi 0, %s112
    %s113 = sphi 0, %s110
    %s114 = sphi 0, %s113
    %s130 = sphi 0, %s114
  $region4: #{tpu_custom_call.1} parent=0 // loop_header_branch
    %14 = sbr.rel (%p12) target = $region8
  $region5: #{tpu_custom_call.1} parent=0 // loop_body
    %s16 = ssub.s32 %s11, 1
    %s17 = ssub.s32 %s11, 2
    %s18 = sadd.s32 %s11, 1
    %s19 = ssub.s32 %s11, %s18
    %p20 = scmp.eq.s32.totalorder %s19, 0
    %s22 = sadd.s32 %s21, 1
    %s23 = scalar_select %p20, %s21, %s22
    %p26 = pneg %p20
    %p27 = scmp.eq.s32.totalorder %s11, 1
    %p28 = por %p26, %p27
    %p29 = scmp.ne.s32.totalorder %s21, %s24
    %p30 = scmp.eq.s32.totalorder %s11, 0
    %p31 = por %p29, %p30
    %p32 = scmp.ne.s32.totalorder %s21, %s24
    %p33 = scmp.eq.s32.totalorder %s16, 1
    %p34 = por %p32, %p33
    %p35 = scmp.ne.s32.totalorder %s24, %s25
    %p36 = scmp.eq.s32.totalorder %s16, 0
    %p37 = por %p35, %p36
    %p38 = scmp.ne.s32.totalorder %s24, %s25
    %p39 = scmp.eq.s32.totalorder %s17, 1
    %p40 = por %p38, %p39
    %p42 = scmp.ne.s32.totalorder %s25, %s41
    %p43 = scmp.eq.s32.totalorder %s17, 0
    %p44 = por %p42, %p43
    %s46 = sadd.s32 %s45, 1
    %p49 = scmp.eq.s32.totalorder %s11, 1
    %p50 = scmp.ne.s32.totalorder %s45, %s47
    %p51 = scmp.eq.s32.totalorder %s11, 0
    %p52 = por %p50, %p51
    %p53 = scmp.ne.s32.totalorder %s45, %s47
    %p54 = scmp.eq.s32.totalorder %s16, 1
    %p55 = por %p53, %p54
    %p56 = scmp.ne.s32.totalorder %s47, %s48
    %p57 = scmp.eq.s32.totalorder %s16, 0
    %p58 = por %p56, %p57
    %p59 = scmp.ne.s32.totalorder %s47, %s48
    %p60 = scmp.eq.s32.totalorder %s17, 1
    %p61 = por %p59, %p60
    %p63 = scmp.ne.s32.totalorder %s48, %s62
    %p64 = scmp.eq.s32.totalorder %s17, 0
    %p65 = por %p63, %p64
    %s67 = sadd.s32 %s66, 1
    %p70 = scmp.eq.s32.totalorder %s11, 1
    %p71 = scmp.ne.s32.totalorder %s66, %s68
    %p72 = scmp.eq.s32.totalorder %s11, 0
    %p73 = por %p71, %p72
    %p74 = scmp.ne.s32.totalorder %s66, %s68
    %p75 = scmp.eq.s32.totalorder %s16, 1
    %p76 = por %p74, %p75
    %p77 = scmp.ne.s32.totalorder %s68, %s69
    %p78 = scmp.eq.s32.totalorder %s16, 0
    %p79 = por %p77, %p78
    %p80 = scmp.ne.s32.totalorder %s68, %s69
    %p81 = scmp.eq.s32.totalorder %s17, 1
    %p82 = por %p80, %p81
    %p84 = scmp.ne.s32.totalorder %s69, %s83
    %p85 = scmp.eq.s32.totalorder %s17, 0
    %p86 = por %p84, %p85
    %s88 = sadd.s32 %s87, 1
    %p91 = scmp.eq.s32.totalorder %s11, 1
    %p92 = scmp.ne.s32.totalorder %s87, %s89
    %p93 = scmp.eq.s32.totalorder %s11, 0
    %p94 = por %p92, %p93
    %p95 = scmp.ne.s32.totalorder %s87, %s89
    %p96 = scmp.eq.s32.totalorder %s16, 1
    %p97 = por %p95, %p96
    %p98 = scmp.ne.s32.totalorder %s89, %s90
    %p99 = scmp.eq.s32.totalorder %s16, 0
    %p100 = por %p98, %p99
    %p101 = scmp.ne.s32.totalorder %s89, %s90
    %p102 = scmp.eq.s32.totalorder %s17, 1
    %p103 = por %p101, %p102
    %p105 = scmp.ne.s32.totalorder %s90, %s104
    %p106 = scmp.eq.s32.totalorder %s17, 0
    %p107 = por %p105, %p106
    %s108 = ssub.s32 %s11, %s18
    %p109 = scmp.eq.s32.totalorder %s108, 0
    %s111 = sadd.s32 %s110, 1
    %s112 = scalar_select %p109, %s110, %s111
    %p115 = pneg %p109
    %p116 = scmp.eq.s32.totalorder %s11, 1
    %p117 = por %p115, %p116
    %p118 = scmp.ne.s32.totalorder %s110, %s113
    %p119 = scmp.eq.s32.totalorder %s11, 0
    %p120 = por %p118, %p119
    %p121 = scmp.ne.s32.totalorder %s110, %s113
    %p122 = scmp.eq.s32.totalorder %s16, 1
    %p123 = por %p121, %p122
    %p124 = scmp.ne.s32.totalorder %s113, %s114
    %p125 = scmp.eq.s32.totalorder %s16, 0
    %p126 = por %p124, %p125
    %p127 = scmp.ne.s32.totalorder %s113, %s114
    %p128 = scmp.eq.s32.totalorder %s17, 1
    %p129 = por %p127, %p128
    %p131 = scmp.ne.s32.totalorder %s114, %s130
    %p132 = scmp.eq.s32.totalorder %s17, 0
    %p133 = por %p131, %p132
    %p134 = scmp.le.s32.totalorder 1, %s11
    %p135 = scmp.lt.s32.totalorder %s11, 3
    %p136 = pnand %p134, %p135
    %p137 = pneg %p136
    // Predicated region
    $region9: #{tpu_custom_call.1} parent=5 // pred_check
      _
    $region10: #{tpu_custom_call.1} parent=5 // pred_check_branch
      %139 = sbr.rel (%p136) target = $region12
    $region11: #{tpu_custom_call.1} parent=5 // pred_region
      %s140 = ssub.s32 %s11, 1
      // Predicated region
      $region13: #{tpu_custom_call.1} parent=11 // pred_check
        %p141 = pneg %p58
      $region14: #{tpu_custom_call.1} parent=11 // pred_check_branch
        %143 = sbr.rel (%p141) target = $region16
      $region15: #{tpu_custom_call.1} parent=11 // pred_region
        _
      $region16: #{tpu_custom_call.1} parent=11 // pred_fallthru
        _
      // Predicated region
      $region17: #{tpu_custom_call.1} parent=11 // pred_check
        %p144 = pneg %p79
      $region18: #{tpu_custom_call.1} parent=11 // pred_check_branch
        %146 = sbr.rel (%p144) target = $region20
      $region19: #{tpu_custom_call.1} parent=11 // pred_region
        _
      $region20: #{tpu_custom_call.1} parent=11 // pred_fallthru
        _
      // Predicated region
      $region21: #{tpu_custom_call.1} parent=11 // pred_check
        %p147 = pneg %p100
      $region22: #{tpu_custom_call.1} parent=11 // pred_check_branch
        %149 = sbr.rel (%p147) target = $region24
      $region23: #{tpu_custom_call.1} parent=11 // pred_region
        _
      $region24: #{tpu_custom_call.1} parent=11 // pred_fallthru
        _
    $region12: #{tpu_custom_call.1} parent=5 // pred_fallthru
      _
    %p150 = scmp.lt.s32.totalorder %s11, 2
    // Predicated region
    $region25: #{tpu_custom_call.1} parent=5 // pred_check
      %p151 = pneg %p150
    $region26: #{tpu_custom_call.1} parent=5 // pred_check_branch
      %153 = sbr.rel (%p151) target = $region28
    $region27: #{tpu_custom_call.1} parent=5 // pred_region
      // Predicated region
      $region29: #{tpu_custom_call.1} parent=27 // pred_check
        %p154 = pneg %p31
      $region30: #{tpu_custom_call.1} parent=27 // pred_check_branch
        %156 = sbr.rel (%p154) target = $region32
      $region31: #{tpu_custom_call.1} parent=27 // pred_region
        %s157 = smul.u32 16, %s11
        %p158 = scmp.lt.s32.totalorder %s157, 31
        %s159 = scalar_select %p158, %s157, 31
        %s160 = smul.addr %s159, 8
        %s161 = scalar_lea.vmem %s0, %s160
        %s162 = smul.u32 16, %s11
      $region32: #{tpu_custom_call.1} parent=27 // pred_fallthru
        _
    $region28: #{tpu_custom_call.1} parent=5 // pred_fallthru
      _
    %p163 = scmp.le.s32.totalorder 1, %s11
    %p164 = scmp.lt.s32.totalorder %s11, 3
    %p165 = pnand %p163, %p164
    %p166 = pneg %p165
    // Predicated region
    $region33: #{tpu_custom_call.1} parent=5 // pred_check
      _
    $region34: #{tpu_custom_call.1} parent=5 // pred_check_branch
      %168 = sbr.rel (%p165) target = $region36
    $region35: #{tpu_custom_call.1} parent=5 // pred_region
      %s169 = ssub.s32 %s11, 1
      %s170 = smul.u32 16, %s16
      %p171 = scmp.lt.s32.totalorder %s170, 31
      %s172 = scalar_select %p171, %s170, 31
      %s173 = smul.addr %s172, 8
      %s174 = scalar_lea.vmem %s0, %s173
      %p175 = pneg %p37
      %p176 = pneg %p34
      %p177 = pneg %p58
      %p178 = pneg %p55
      %p179 = pneg %p79
      %p180 = pneg %p76
      %p181 = pneg %p100
      %p182 = pneg %p97
      %p183 = pneg %p126
      %p184 = pneg %p123
      %s185 = smul.u32 16, %s16
      %p186 = scmp.lt.s32.totalorder %s185, 31
      %s187 = scalar_select %p186, %s185, 31
      %s188 = smul.addr %s187, 8
      %s189 = scalar_lea.vmem %s4, %s188
      %s190 = smul.u32 16, %s16
      %p191 = scmp.lt.s32.totalorder %s190, 31
      %s192 = scalar_select %p191, %s190, 31
      %s193 = smul.addr %s192, 8
      %s194 = scalar_lea.vmem %s0, %s193
      %s195 = smul.u32 16, %s16
      %s196 = smul.u32 16, %s16
      %p197 = scmp.lt.s32.totalorder %s196, 31
      %s198 = scalar_select %p197, %s196, 31
      %s199 = smul.addr %s198, 8
      %s200 = scalar_lea.vmem %s4, %s199
      %s201 = smul.u32 16, %s16
      %v202 = vld [vmem:[%s194] sm:$0xff]
      %v203 = vld [vmem:[%s194 + $0x8] sm:$0xff]
      %v204 = vld [vmem:[%s194 + $0x10] sm:$0xff]
      %v205 = vld [vmem:[%s194 + $0x18] sm:$0xff]
      %v206 = vld [vmem:[%s194 + $0x20] sm:$0xff]
      %v207 = vld [vmem:[%s194 + $0x28] sm:$0xff]
      %v208 = vld [vmem:[%s194 + $0x30] sm:$0xff]
      %v209 = vld [vmem:[%s194 + $0x38] sm:$0xff]
      %v210 = vld [vmem:[%s194 + $0x40] sm:$0xff]
      %v211 = vld [vmem:[%s194 + $0x48] sm:$0xff]
      %v212 = vld [vmem:[%s194 + $0x50] sm:$0xff]
      %v213 = vld [vmem:[%s194 + $0x58] sm:$0xff]
      %v214 = vld [vmem:[%s194 + $0x60] sm:$0xff]
      %v215 = vld [vmem:[%s194 + $0x68] sm:$0xff]
      %v216 = vld [vmem:[%s194 + $0x70] sm:$0xff]
      %v217 = vld [vmem:[%s194 + $0x78] sm:$0xff]
      %v218 = vld [vmem:[%s1] sm:$0xff]
      %v219 = vld [vmem:[%s1 + $0x8] sm:$0xff]
      %v220 = vld [vmem:[%s1 + $0x10] sm:$0xff]
      %v221 = vld [vmem:[%s1 + $0x18] sm:$0xff]
      %vm222 = vcmask 261120
      %v224 = vsel %vm222, %v202, 0
      %v227 = vsel %vm222, %v203, 0
      %v230 = vsel %vm222, %v204, 0
      %v233 = vsel %vm222, %v205, 0
      %v236 = vsel %vm222, %v206, 0
      %v239 = vsel %vm222, %v207, 0
      %v242 = vsel %vm222, %v208, 0
      %v245 = vsel %vm222, %v209, 0
      %v248 = vsel %vm222, %v210, 0
      %v251 = vsel %vm222, %v211, 0
      %v254 = vsel %vm222, %v212, 0
      %v257 = vsel %vm222, %v213, 0
      %v260 = vsel %vm222, %v214, 0
      %v263 = vsel %vm222, %v215, 0
      %v266 = vsel %vm222, %v216, 0
      %v269 = vsel %vm222, %v217, 0
      %271 = vmatprep.subr.mxu0 0.0
      %272 = vmatpush1.msra.mxu0 0.0
      %273 = vmatprep.subr.mxu0 0.0
      %274 = vmatpush1.msra.mxu0 0.0
      %275 = vmatprep.subr.mxu0 0.0
      %276 = vmatpush1.msra.mxu0 0.0
      %277 = vmatprep.subr.mxu0 0.0
      %278 = vmatpush1.msra.mxu0 0.0
      %279 = vmatprep.subr.mxu0 0.0
      %280 = vmatpush1.msra.mxu0 0.0
      %281 = vmatprep.subr.mxu0 0.0
      %282 = vmatpush1.msra.mxu0 0.0
      %283 = vmatprep.subr.mxu0 0.0
      %284 = vmatpush1.msra.mxu0 0.0
      %285 = vmatprep.subr.mxu0 0.0
      %286 = vmatpush1.msra.mxu0 0.0
      %287 = vmatprep.subr.mxu0 0.0
      %288 = vmatpush1.msra.mxu0 0.0
      %289 = vmatprep.subr.mxu0 0.0
      %290 = vmatpush1.msra.mxu0 0.0
      %291 = vmatprep.subr.mxu0 0.0
      %292 = vmatpush1.msra.mxu0 0.0
      %293 = vmatprep.subr.mxu0 0.0
      %294 = vmatpush1.msra.mxu0 0.0
      %295 = vmatprep.subr.mxu0 0.0
      %296 = vmatpush1.msra.mxu0 %v221
      %297 = vmatprep.subr.mxu0 0.0
      %298 = vmatpush1.msra.mxu0 %v220
      %299 = vmatprep.subr.mxu0 0.0
      %300 = vmatpush1.msra.mxu0 %v219
      %301 = vmatprep.subr.mxu0 0.0
      %302 = vmatpush1.msra.mxu0 %v218
      %303 = vmatprep.subr.mxu0 0.0
      %304 = vmatpush2.msra.mxu0 0.0
      %305 = vmatprep.subr.mxu0 0.0
      %306 = vmatpush2.msra.mxu0 0.0
      %307 = vmatprep.subr.mxu0 0.0
      %308 = vmatpush2.msra.mxu0 0.0
      %309 = vmatprep.subr.mxu0 0.0
      %310 = vmatpush2.msra.mxu0 0.0
      %311 = vmatprep.subr.mxu0 0.0
      %312 = vmatpush2.msra.mxu0 0.0
      %313 = vmatprep.subr.mxu0 0.0
      %314 = vmatpush2.msra.mxu0 0.0
      %315 = vmatprep.subr.mxu0 0.0
      %316 = vmatpush2.msra.mxu0 0.0
      %317 = vmatprep.subr.mxu0 0.0
      %318 = vmatpush2.msra.mxu0 0.0
      %319 = vmatprep.subr.mxu0 0.0
      %320 = vmatpush2.msra.mxu0 0.0
      %321 = vmatprep.subr.mxu0 0.0
      %322 = vmatpush2.msra.mxu0 0.0
      %323 = vmatprep.subr.mxu0 0.0
      %324 = vmatpush2.msra.mxu0 0.0
      %325 = vmatprep.subr.mxu0 0.0
      %326 = vmatpush2.msra.mxu0 0.0
      %327 = vmatprep.subr.mxu0 0.0
      %328 = vmatpush2.msra.mxu0 0.0
      %329 = vmatprep.subr.mxu0 0.0
      %330 = vmatpush2.msra.mxu0 0.0
      %331 = vmatprep.subr.mxu0 0.0
      %332 = vmatpush2.msra.mxu0 0.0
      %333 = vmatprep.subr.mxu0 0.0
      %334 = vmatpush2.msra.mxu0 0.0
      %335 = vmatprep.mubr.f32.mxu0 0.0
      %336 = vmatmul.mubr.f32.gmra.mxu0 %v224
      %v337 = vpop.f32.mrf.mxu0
      %v338 = vadd.f32 0.0, %v337
      %v339 = vpop.f32.mrf.mxu0
      %340 = vmatprep.mubr.f32.mxu0 0.0
      %341 = vmatmul.mubr.f32.gmra.mxu0 %v227
      %v342 = vpop.f32.mrf.mxu0
      %v343 = vadd.f32 0.0, %v342
      %v344 = vpop.f32.mrf.mxu0
      %345 = vmatprep.mubr.f32.mxu0 0.0
      %346 = vmatmul.mubr.f32.gmra.mxu0 %v230
      %v347 = vpop.f32.mrf.mxu0
      %v348 = vadd.f32 0.0, %v347
      %v349 = vpop.f32.mrf.mxu0
      %350 = vmatprep.mubr.f32.mxu0 0.0
      %351 = vmatmul.mubr.f32.gmra.mxu0 %v233
      %v352 = vpop.f32.mrf.mxu0
      %v353 = vadd.f32 0.0, %v352
      %v354 = vpop.f32.mrf.mxu0
      %355 = vmatprep.mubr.f32.mxu0 0.0
      %356 = vmatmul.mubr.f32.gmra.mxu0 %v236
      %v357 = vpop.f32.mrf.mxu0
      %v358 = vadd.f32 0.0, %v357
      %v359 = vpop.f32.mrf.mxu0
      %360 = vmatprep.mubr.f32.mxu0 0.0
      %361 = vmatmul.mubr.f32.gmra.mxu0 %v239
      %v362 = vpop.f32.mrf.mxu0
      %v363 = vadd.f32 0.0, %v362
      %v364 = vpop.f32.mrf.mxu0
      %365 = vmatprep.mubr.f32.mxu0 0.0
      %366 = vmatmul.mubr.f32.gmra.mxu0 %v242
      %v367 = vpop.f32.mrf.mxu0
      %v368 = vadd.f32 0.0, %v367
      %v369 = vpop.f32.mrf.mxu0
      %370 = vmatprep.mubr.f32.mxu0 0.0
      %371 = vmatmul.mubr.f32.gmra.mxu0 %v245
      %v372 = vpop.f32.mrf.mxu0
      %v373 = vadd.f32 0.0, %v372
      %v374 = vpop.f32.mrf.mxu0
      %375 = vmatprep.mubr.f32.mxu0 0.0
      %376 = vmatmul.mubr.f32.gmra.mxu0 %v248
      %v377 = vpop.f32.mrf.mxu0
      %v378 = vadd.f32 0.0, %v377
      %v379 = vpop.f32.mrf.mxu0
      %380 = vmatprep.mubr.f32.mxu0 0.0
      %381 = vmatmul.mubr.f32.gmra.mxu0 %v251
      %v382 = vpop.f32.mrf.mxu0
      %v383 = vadd.f32 0.0, %v382
      %v384 = vpop.f32.mrf.mxu0
      %385 = vmatprep.mubr.f32.mxu0 0.0
      %386 = vmatmul.mubr.f32.gmra.mxu0 %v254
      %v387 = vpop.f32.mrf.mxu0
      %v388 = vadd.f32 0.0, %v387
      %v389 = vpop.f32.mrf.mxu0
      %390 = vmatprep.mubr.f32.mxu0 0.0
      %391 = vmatmul.mubr.f32.gmra.mxu0 %v257
      %v392 = vpop.f32.mrf.mxu0
      %v393 = vadd.f32 0.0, %v392
      %v394 = vpop.f32.mrf.mxu0
      %395 = vmatprep.mubr.f32.mxu0 0.0
      %396 = vmatmul.mubr.f32.gmra.mxu0 %v260
      %v397 = vpop.f32.mrf.mxu0
      %v398 = vadd.f32 0.0, %v397
      %v399 = vpop.f32.mrf.mxu0
      %400 = vmatprep.mubr.f32.mxu0 0.0
      %401 = vmatmul.mubr.f32.gmra.mxu0 %v263
      %v402 = vpop.f32.mrf.mxu0
      %v403 = vadd.f32 0.0, %v402
      %v404 = vpop.f32.mrf.mxu0
      %405 = vmatprep.mubr.f32.mxu0 0.0
      %406 = vmatmul.mubr.f32.gmra.mxu0 %v266
      %v407 = vpop.f32.mrf.mxu0
      %v408 = vadd.f32 0.0, %v407
      %v409 = vpop.f32.mrf.mxu0
      %410 = vmatprep.mubr.f32.mxu0 0.0
      %411 = vmatmul.mubr.f32.gmra.mxu0 %v269
      %v412 = vpop.f32.mrf.mxu0
      %v413 = vadd.f32 0.0, %v412
      %v414 = vpop.f32.mrf.mxu0
      %415 = vdwg.mxu0
      %v416 = vld [vmem:[%s2] sm:$0x1]
      %v417 = vmul.f32 %v202, %v202
      %v418 = vmul.f32 %v203, %v203
      %v419 = vmul.f32 %v204, %v204
      %v420 = vmul.f32 %v205, %v205
      %v421 = vmul.f32 %v206, %v206
      %v422 = vmul.f32 %v207, %v207
      %v423 = vmul.f32 %v208, %v208
      %v424 = vmul.f32 %v209, %v209
      %v425 = vmul.f32 %v210, %v210
      %v426 = vmul.f32 %v211, %v211
      %v427 = vmul.f32 %v212, %v212
      %v428 = vmul.f32 %v213, %v213
      %v429 = vmul.f32 %v214, %v214
      %v430 = vmul.f32 %v215, %v215
      %v431 = vmul.f32 %v216, %v216
      %v432 = vmul.f32 %v217, %v217
      %v434 = vlaneseq
      %v435 = vshrl.u32 %v434, 7
      %v436 = vsub.s32 0, %v435
      %v437 = vrot.slane %v416, %v436
      %v439 = vmul.f32 %v417, %v437
      %v440 = vmul.f32 %v418, %v437
      %v441 = vmul.f32 %v419, %v437
      %v442 = vmul.f32 %v420, %v437
      %v443 = vmul.f32 %v421, %v437
      %v444 = vmul.f32 %v422, %v437
      %v445 = vmul.f32 %v423, %v437
      %v446 = vmul.f32 %v424, %v437
      %v447 = vmul.f32 %v425, %v437
      %v448 = vmul.f32 %v426, %v437
      %v449 = vmul.f32 %v427, %v437
      %v450 = vmul.f32 %v428, %v437
      %v451 = vmul.f32 %v429, %v437
      %v452 = vmul.f32 %v430, %v437
      %v453 = vmul.f32 %v431, %v437
      %v454 = vmul.f32 %v432, %v437
      %v455 = vsel %vm222, %v439, 0.0
      %456 = vadd.xlane.f32.xlu0 %v455
      %v457 = vpop.xlane.xlu0 %456
      %v458 = vsel %vm222, %v440, 0.0
      %459 = vadd.xlane.f32.xlu0 %v458
      %v460 = vpop.xlane.xlu0 %459
      %v461 = vsel %vm222, %v441, 0.0
      %462 = vadd.xlane.f32.xlu0 %v461
      %v463 = vpop.xlane.xlu0 %462
      %v464 = vsel %vm222, %v442, 0.0
      %465 = vadd.xlane.f32.xlu0 %v464
      %v466 = vpop.xlane.xlu0 %465
      %v467 = vsel %vm222, %v443, 0.0
      %468 = vadd.xlane.f32.xlu0 %v467
      %v469 = vpop.xlane.xlu0 %468
      %v470 = vsel %vm222, %v444, 0.0
      %471 = vadd.xlane.f32.xlu0 %v470
      %v472 = vpop.xlane.xlu0 %471
      %v473 = vsel %vm222, %v445, 0.0
      %474 = vadd.xlane.f32.xlu0 %v473
      %v475 = vpop.xlane.xlu0 %474
      %v476 = vsel %vm222, %v446, 0.0
      %477 = vadd.xlane.f32.xlu0 %v476
      %v478 = vpop.xlane.xlu0 %477
      %v479 = vsel %vm222, %v447, 0.0
      %480 = vadd.xlane.f32.xlu0 %v479
      %v481 = vpop.xlane.xlu0 %480
      %v482 = vsel %vm222, %v448, 0.0
      %483 = vadd.xlane.f32.xlu0 %v482
      %v484 = vpop.xlane.xlu0 %483
      %v485 = vsel %vm222, %v449, 0.0
      %486 = vadd.xlane.f32.xlu0 %v485
      %v487 = vpop.xlane.xlu0 %486
      %v488 = vsel %vm222, %v450, 0.0
      %489 = vadd.xlane.f32.xlu0 %v488
      %v490 = vpop.xlane.xlu0 %489
      %v491 = vsel %vm222, %v451, 0.0
      %492 = vadd.xlane.f32.xlu0 %v491
      %v493 = vpop.xlane.xlu0 %492
      %v494 = vsel %vm222, %v452, 0.0
      %495 = vadd.xlane.f32.xlu0 %v494
      %v496 = vpop.xlane.xlu0 %495
      %v497 = vsel %vm222, %v453, 0.0
      %498 = vadd.xlane.f32.xlu0 %v497
      %v499 = vpop.xlane.xlu0 %498
      %v500 = vsel %vm222, %v454, 0.0
      %501 = vadd.xlane.f32.xlu0 %v500
      %v502 = vpop.xlane.xlu0 %501
      %v503 = vmul.f32 %v338, %v338
      %v504 = vmul.f32 %v343, %v343
      %v505 = vmul.f32 %v348, %v348
      %v506 = vmul.f32 %v353, %v353
      %v507 = vmul.f32 %v358, %v358
      %v508 = vmul.f32 %v363, %v363
      %v509 = vmul.f32 %v368, %v368
      %v510 = vmul.f32 %v373, %v373
      %v511 = vmul.f32 %v378, %v378
      %v512 = vmul.f32 %v383, %v383
      %v513 = vmul.f32 %v388, %v388
      %v514 = vmul.f32 %v393, %v393
      %v515 = vmul.f32 %v398, %v398
      %v516 = vmul.f32 %v403, %v403
      %v517 = vmul.f32 %v408, %v408
      %v518 = vmul.f32 %v413, %v413
      %vm519 = vcmask 130048
      %v520 = vsel %vm519, %v503, 0.0
      %521 = vadd.xlane.f32.xlu0 %v520
      %v522 = vpop.xlane.xlu0 %521
      %v523 = vsel %vm519, %v504, 0.0
      %524 = vadd.xlane.f32.xlu0 %v523
      %v525 = vpop.xlane.xlu0 %524
      %v526 = vsel %vm519, %v505, 0.0
      %527 = vadd.xlane.f32.xlu0 %v526
      %v528 = vpop.xlane.xlu0 %527
      %v529 = vsel %vm519, %v506, 0.0
      %530 = vadd.xlane.f32.xlu0 %v529
      %v531 = vpop.xlane.xlu0 %530
      %v532 = vsel %vm519, %v507, 0.0
      %533 = vadd.xlane.f32.xlu0 %v532
      %v534 = vpop.xlane.xlu0 %533
      %v535 = vsel %vm519, %v508, 0.0
      %536 = vadd.xlane.f32.xlu0 %v535
      %v537 = vpop.xlane.xlu0 %536
      %v538 = vsel %vm519, %v509, 0.0
      %539 = vadd.xlane.f32.xlu0 %v538
      %v540 = vpop.xlane.xlu0 %539
      %v541 = vsel %vm519, %v510, 0.0
      %542 = vadd.xlane.f32.xlu0 %v541
      %v543 = vpop.xlane.xlu0 %542
      %v544 = vsel %vm519, %v511, 0.0
      %545 = vadd.xlane.f32.xlu0 %v544
      %v546 = vpop.xlane.xlu0 %545
      %v547 = vsel %vm519, %v512, 0.0
      %548 = vadd.xlane.f32.xlu0 %v547
      %v549 = vpop.xlane.xlu0 %548
      %v550 = vsel %vm519, %v513, 0.0
      %551 = vadd.xlane.f32.xlu0 %v550
      %v552 = vpop.xlane.xlu0 %551
      %v553 = vsel %vm519, %v514, 0.0
      %554 = vadd.xlane.f32.xlu0 %v553
      %v555 = vpop.xlane.xlu0 %554
      %v556 = vsel %vm519, %v515, 0.0
      %557 = vadd.xlane.f32.xlu0 %v556
      %v558 = vpop.xlane.xlu0 %557
      %v559 = vsel %vm519, %v516, 0.0
      %560 = vadd.xlane.f32.xlu0 %v559
      %v561 = vpop.xlane.xlu0 %560
      %v562 = vsel %vm519, %v517, 0.0
      %563 = vadd.xlane.f32.xlu0 %v562
      %v564 = vpop.xlane.xlu0 %563
      %v565 = vsel %vm519, %v518, 0.0
      %566 = vadd.xlane.f32.xlu0 %v565
      %v567 = vpop.xlane.xlu0 %566
      %v568 = vsub.f32 %v522, %v457
      %v569 = vsub.f32 %v525, %v460
      %v570 = vsub.f32 %v528, %v463
      %v571 = vsub.f32 %v531, %v466
      %v572 = vsub.f32 %v534, %v469
      %v573 = vsub.f32 %v537, %v472
      %v574 = vsub.f32 %v540, %v475
      %v575 = vsub.f32 %v543, %v478
      %v576 = vsub.f32 %v546, %v481
      %v577 = vsub.f32 %v549, %v484
      %v578 = vsub.f32 %v552, %v487
      %v579 = vsub.f32 %v555, %v490
      %v580 = vsub.f32 %v558, %v493
      %v581 = vsub.f32 %v561, %v496
      %v582 = vsub.f32 %v564, %v499
      %v583 = vsub.f32 %v567, %v502
      %v584 = vmul.f32 %v568, 0.5
      %v585 = vmul.f32 %v569, 0.5
      %v586 = vmul.f32 %v570, 0.5
      %v587 = vmul.f32 %v571, 0.5
      %v588 = vmul.f32 %v572, 0.5
      %v589 = vmul.f32 %v573, 0.5
      %v590 = vmul.f32 %v574, 0.5
      %v591 = vmul.f32 %v575, 0.5
      %v592 = vmul.f32 %v576, 0.5
      %v593 = vmul.f32 %v577, 0.5
      %v594 = vmul.f32 %v578, 0.5
      %v595 = vmul.f32 %v579, 0.5
      %v596 = vmul.f32 %v580, 0.5
      %v597 = vmul.f32 %v581, 0.5
      %v598 = vmul.f32 %v582, 0.5
      %v599 = vmul.f32 %v583, 0.5
      %v600 = vadd.f32 %v338, %v584
      %v601 = vadd.f32 %v343, %v585
      %v602 = vadd.f32 %v348, %v586
      %v603 = vadd.f32 %v353, %v587
      %v604 = vadd.f32 %v358, %v588
      %v605 = vadd.f32 %v363, %v589
      %v606 = vadd.f32 %v368, %v590
      %v607 = vadd.f32 %v373, %v591
      %v608 = vadd.f32 %v378, %v592
      %v609 = vadd.f32 %v383, %v593
      %v610 = vadd.f32 %v388, %v594
      %v611 = vadd.f32 %v393, %v595
      %v612 = vadd.f32 %v398, %v596
      %v613 = vadd.f32 %v403, %v597
      %v614 = vadd.f32 %v408, %v598
      %v615 = vadd.f32 %v413, %v599
      %s616 = sld [smem:[#allocation2]]
      %v617 = vstv %s616
      %v618 = vadd.f32 %v600, %v617
      %v619 = vadd.f32 %v601, %v617
      %v620 = vadd.f32 %v602, %v617
      %v621 = vadd.f32 %v603, %v617
      %v622 = vadd.f32 %v604, %v617
      %v623 = vadd.f32 %v605, %v617
      %v624 = vadd.f32 %v606, %v617
      %v625 = vadd.f32 %v607, %v617
      %v626 = vadd.f32 %v608, %v617
      %v627 = vadd.f32 %v609, %v617
      %v628 = vadd.f32 %v610, %v617
      %v629 = vadd.f32 %v611, %v617
      %v630 = vadd.f32 %v612, %v617
      %v631 = vadd.f32 %v613, %v617
      %v632 = vadd.f32 %v614, %v617
      %v633 = vadd.f32 %v615, %v617
      %v634 = vxor.u32 %v618, 2147483648
      %v635 = vxor.u32 %v619, 2147483648
      %v636 = vxor.u32 %v620, 2147483648
      %v637 = vxor.u32 %v621, 2147483648
      %v638 = vxor.u32 %v622, 2147483648
      %v639 = vxor.u32 %v623, 2147483648
      %v640 = vxor.u32 %v624, 2147483648
      %v641 = vxor.u32 %v625, 2147483648
      %v642 = vxor.u32 %v626, 2147483648
      %v643 = vxor.u32 %v627, 2147483648
      %v644 = vxor.u32 %v628, 2147483648
      %v645 = vxor.u32 %v629, 2147483648
      %v646 = vxor.u32 %v630, 2147483648
      %v647 = vxor.u32 %v631, 2147483648
      %v648 = vxor.u32 %v632, 2147483648
      %v649 = vxor.u32 %v633, 2147483648
      %v650 = vmul.f32 %v634, 1.442695
      %v651 = vpow.pop %v650
      %v652 = vmul.f32 %v635, 1.442695
      %v653 = vpow.pop %v652
      %v654 = vmul.f32 %v636, 1.442695
      %v655 = vpow.pop %v654
      %v656 = vmul.f32 %v637, 1.442695
      %v657 = vpow.pop %v656
      %v658 = vmul.f32 %v638, 1.442695
      %v659 = vpow.pop %v658
      %v660 = vmul.f32 %v639, 1.442695
      %v661 = vpow.pop %v660
      %v662 = vmul.f32 %v640, 1.442695
      %v663 = vpow.pop %v662
      %v664 = vmul.f32 %v641, 1.442695
      %v665 = vpow.pop %v664
      %v666 = vmul.f32 %v642, 1.442695
      %v667 = vpow.pop %v666
      %v668 = vmul.f32 %v643, 1.442695
      %v669 = vpow.pop %v668
      %v670 = vmul.f32 %v644, 1.442695
      %v671 = vpow.pop %v670
      %v672 = vmul.f32 %v645, 1.442695
      %v673 = vpow.pop %v672
      %v674 = vmul.f32 %v646, 1.442695
      %v675 = vpow.pop %v674
      %v676 = vmul.f32 %v647, 1.442695
      %v677 = vpow.pop %v676
      %v678 = vmul.f32 %v648, 1.442695
      %v679 = vpow.pop %v678
      %v680 = vmul.f32 %v649, 1.442695
      %v681 = vpow.pop %v680
      %v682 = vadd.f32 %v651, 1.0
      %v683 = vadd.f32 %v653, 1.0
      %v684 = vadd.f32 %v655, 1.0
      %v685 = vadd.f32 %v657, 1.0
      %v686 = vadd.f32 %v659, 1.0
      %v687 = vadd.f32 %v661, 1.0
      %v688 = vadd.f32 %v663, 1.0
      %v689 = vadd.f32 %v665, 1.0
      %v690 = vadd.f32 %v667, 1.0
      %v691 = vadd.f32 %v669, 1.0
      %v692 = vadd.f32 %v671, 1.0
      %v693 = vadd.f32 %v673, 1.0
      %v694 = vadd.f32 %v675, 1.0
      %v695 = vadd.f32 %v677, 1.0
      %v696 = vadd.f32 %v679, 1.0
      %v697 = vadd.f32 %v681, 1.0
      %v698 = vrcp.pop %v682
      %v699 = vmul.f32 1.0, %v698
      %v700 = vrcp.pop %v683
      %v701 = vmul.f32 1.0, %v700
      %v702 = vrcp.pop %v684
      %v703 = vmul.f32 1.0, %v702
      %v704 = vrcp.pop %v685
      %v705 = vmul.f32 1.0, %v704
      %v706 = vrcp.pop %v686
      %v707 = vmul.f32 1.0, %v706
      %v708 = vrcp.pop %v687
      %v709 = vmul.f32 1.0, %v708
      %v710 = vrcp.pop %v688
      %v711 = vmul.f32 1.0, %v710
      %v712 = vrcp.pop %v689
      %v713 = vmul.f32 1.0, %v712
      %v714 = vrcp.pop %v690
      %v715 = vmul.f32 1.0, %v714
      %v716 = vrcp.pop %v691
      %v717 = vmul.f32 1.0, %v716
      %v718 = vrcp.pop %v692
      %v719 = vmul.f32 1.0, %v718
      %v720 = vrcp.pop %v693
      %v721 = vmul.f32 1.0, %v720
      %v722 = vrcp.pop %v694
      %v723 = vmul.f32 1.0, %v722
      %v724 = vrcp.pop %v695
      %v725 = vmul.f32 1.0, %v724
      %v726 = vrcp.pop %v696
      %v727 = vmul.f32 1.0, %v726
      %v728 = vrcp.pop %v697
      %v729 = vmul.f32 1.0, %v728
      %746 = vrot.lane.b32.xlu0 %v699, 112
      %v747 = vpop.permute.xlu0 %746
      %748 = vrot.lane.b32.xlu0 %v701, 112
      %v749 = vpop.permute.xlu0 %748
      %750 = vrot.lane.b32.xlu0 %v703, 112
      %v751 = vpop.permute.xlu0 %750
      %752 = vrot.lane.b32.xlu0 %v705, 112
      %v753 = vpop.permute.xlu0 %752
      %754 = vrot.lane.b32.xlu0 %v707, 112
      %v755 = vpop.permute.xlu0 %754
      %756 = vrot.lane.b32.xlu0 %v709, 112
      %v757 = vpop.permute.xlu0 %756
      %758 = vrot.lane.b32.xlu0 %v711, 112
      %v759 = vpop.permute.xlu0 %758
      %760 = vrot.lane.b32.xlu0 %v713, 112
      %v761 = vpop.permute.xlu0 %760
      %762 = vrot.lane.b32.xlu0 %v715, 112
      %v763 = vpop.permute.xlu0 %762
      %764 = vrot.lane.b32.xlu0 %v717, 112
      %v765 = vpop.permute.xlu0 %764
      %766 = vrot.lane.b32.xlu0 %v719, 112
      %v767 = vpop.permute.xlu0 %766
      %768 = vrot.lane.b32.xlu0 %v721, 112
      %v769 = vpop.permute.xlu0 %768
      %770 = vrot.lane.b32.xlu0 %v723, 112
      %v771 = vpop.permute.xlu0 %770
      %772 = vrot.lane.b32.xlu0 %v725, 112
      %v773 = vpop.permute.xlu0 %772
      %774 = vrot.lane.b32.xlu0 %v727, 112
      %v775 = vpop.permute.xlu0 %774
      %776 = vrot.lane.b32.xlu0 %v729, 112
      %v777 = vpop.permute.xlu0 %776
      %vm794 = vcmask 7168
      %795 = vst.msk [vmem:[%s200] sm:$0xff] %vm794, %v747
      %796 = vst.msk [vmem:[%s200 + $0x8] sm:$0xff] %vm794, %v749
      %797 = vst.msk [vmem:[%s200 + $0x10] sm:$0xff] %vm794, %v751
      %798 = vst.msk [vmem:[%s200 + $0x18] sm:$0xff] %vm794, %v753
      %799 = vst.msk [vmem:[%s200 + $0x20] sm:$0xff] %vm794, %v755
      %800 = vst.msk [vmem:[%s200 + $0x28] sm:$0xff] %vm794, %v757
      %801 = vst.msk [vmem:[%s200 + $0x30] sm:$0xff] %vm794, %v759
      %802 = vst.msk [vmem:[%s200 + $0x38] sm:$0xff] %vm794, %v761
      %803 = vst.msk [vmem:[%s200 + $0x40] sm:$0xff] %vm794, %v763
      %804 = vst.msk [vmem:[%s200 + $0x48] sm:$0xff] %vm794, %v765
      %805 = vst.msk [vmem:[%s200 + $0x50] sm:$0xff] %vm794, %v767
      %806 = vst.msk [vmem:[%s200 + $0x58] sm:$0xff] %vm794, %v769
      %807 = vst.msk [vmem:[%s200 + $0x60] sm:$0xff] %vm794, %v771
      %808 = vst.msk [vmem:[%s200 + $0x68] sm:$0xff] %vm794, %v773
      %809 = vst.msk [vmem:[%s200 + $0x70] sm:$0xff] %vm794, %v775
      %810 = vst.msk [vmem:[%s200 + $0x78] sm:$0xff] %vm794, %v777
      %s811 = smul.u32 16, %s16
      %p812 = scmp.lt.s32.totalorder %s811, 31
      %s813 = scalar_select %p812, %s811, 31
      %s814 = smul.addr %s813, 8
      %s815 = scalar_lea.vmem %s4, %s814
      // Predicated region
      $region37: #{tpu_custom_call.1} parent=35 // pred_check
        %p816 = pneg %p123
      $region38: #{tpu_custom_call.1} parent=35 // pred_check_branch
        %818 = sbr.rel (%p816) target = $region40
      $region39: #{tpu_custom_call.1} parent=35 // pred_region
        %s819 = smul.u32 16, %s16
      $region40: #{tpu_custom_call.1} parent=35 // pred_fallthru
        _
    $region36: #{tpu_custom_call.1} parent=5 // pred_fallthru
      _
    %p820 = scmp.le.s32.totalorder 2, %s11
    // Predicated region
    $region41: #{tpu_custom_call.1} parent=5 // pred_check
      %p821 = pneg %p820
    $region42: #{tpu_custom_call.1} parent=5 // pred_check_branch
      %823 = sbr.rel (%p821) target = $region44
    $region43: #{tpu_custom_call.1} parent=5 // pred_region
      %s824 = ssub.s32 %s11, 2
      // Predicated region
      $region45: #{tpu_custom_call.1} parent=43 // pred_check
        %p825 = pneg %p129
      $region46: #{tpu_custom_call.1} parent=43 // pred_check_branch
        %827 = sbr.rel (%p825) target = $region48
      $region47: #{tpu_custom_call.1} parent=43 // pred_region
        %s828 = smul.u32 16, %s17
        %p829 = scmp.lt.s32.totalorder %s828, 31
        %s830 = scalar_select %p829, %s828, 31
        %s831 = smul.addr %s830, 8
        %s832 = scalar_lea.vmem %s4, %s831
      $region48: #{tpu_custom_call.1} parent=43 // pred_fallthru
        _
    $region44: #{tpu_custom_call.1} parent=5 // pred_fallthru
      _
  $region6: #{tpu_custom_call.1} parent=0 // loop_footer
    %s15 = sadd.s32 1, %s11
  $region7: #{tpu_custom_call.1} parent=0 // loop_footer_branch
    %10 = sbr.rel target = $region3
  $region8: #{tpu_custom_call.1} parent=0 // loop_exit
    _

</llo_original>
